<compile_context>
chip_gen: v7x
topology: tpu7x:2x2x1
jax: 0.10.0
libtpu: 0.0.40
codegen_flags: <defaults>
</compile_context>

<pallas_src>
import functools

import jax
import jax.numpy as jnp
from jax import lax
from jax.experimental import pallas as pl
from jax.experimental.pallas import tpu as pltpu


def _round_up(v, m):
    return (v + m - 1) // m * m


def _make_kernel(nclass, nclass_pad):
    def kernel(x_ref, w1_ref, b1_ref, wc_ref, bc_ref, o_ref):
        # fc1 + ReLU: x (TB, resSize) . w1 (embedSize, resSize), contract dim 1/1.
        h = lax.dot_general(
            x_ref[...], w1_ref[...],
            dimension_numbers=(((1,), (1,)), ((), ())),
            preferred_element_type=jnp.float32,
        )
        h = jnp.maximum(h + b1_ref[...], 0.0)  # f32 bias + ReLU (VPU, rides under MXU)

        # fc: h (TB, embedSize) . wc (nclass_pad, embedSize), contract dim 1/1.
        logits = lax.dot_general(
            h.astype(wc_ref.dtype), wc_ref[...],
            dimension_numbers=(((1,), (1,)), ((), ())),
            preferred_element_type=jnp.float32,
        )
        logits = logits + bc_ref[...]

        if nclass_pad != nclass:
            # Mask padded class lanes out of the softmax normalizer.
            col = lax.broadcasted_iota(jnp.int32, logits.shape, 1)
            logits = jnp.where(col < nclass, logits, -jnp.inf)

        # Numerically stable LogSoftmax over dim 1 (all f32).
        m = jnp.max(logits, axis=1, keepdims=True)
        shifted = logits - m
        lse = jnp.log(jnp.sum(jnp.exp(shifted), axis=1, keepdims=True))
        o_ref[...] = (shifted - lse).astype(o_ref.dtype)

    return kernel


def _pick_tile_and_vmem(B, res_size, embed_size, ncp, mm_bytes):
    """Largest batch tile (multiple of 8, <=512) keeping double-buffered x/out tiles,
    resident weights and f32 intermediates inside the device VMEM budget."""
    try:
        cap = int(pltpu.get_tpu_info().vmem_capacity_bytes)  # 64 MiB v7x, 128 MiB v5e/v6e
    except Exception:  # conservative fallback (v7x-sized)
        cap = 64 << 20
    budget = (cap * 3) // 4                                   # headroom for compiler scratch
    resident = (embed_size * res_size + ncp * embed_size) * mm_bytes \
               + (embed_size + ncp) * 4                       # weights + biases (f32)
    per_row = 2 * res_size * mm_bytes + 2 * ncp * 4 + (embed_size + ncp) * 4
    tb_cap = (budget - resident) // per_row if budget > resident else 8
    tb = int(max(8, min(512, _round_up(B, 8), (tb_cap // 8) * 8)))
    need = resident + tb * per_row
    vmem_limit = int(min(max(need + (4 << 20), 32 << 20), budget))
    return tb, vmem_limit


@functools.partial(jax.jit, static_argnames=("matmul_dtype",))
def linear_logsoftmax(x, w1, b1, wc, bc, *, matmul_dtype=None):
    """x: (B, resSize); w1: (embedSize, resSize); b1: (embedSize,);
    wc: (nclass, embedSize); bc: (nclass,). Returns (B, nclass) f32 log-probs."""
    B, res_size = x.shape
    embed_size = w1.shape[0]
    nclass = wc.shape[0]
    ncp = _round_up(nclass, 128)                              # lane-dense class dim

    mm_dtype = jnp.dtype(matmul_dtype) if matmul_dtype is not None else jnp.dtype(x.dtype)
    mm_bytes = mm_dtype.itemsize

    tb, vmem_limit = _pick_tile_and_vmem(B, res_size, embed_size, ncp, mm_bytes)
    Bp = _round_up(B, tb)

    # MXU operands (optionally bf16); biases stay f32 and are added in-kernel.
    x_mm = x.astype(mm_dtype)
    if Bp != B:
        x_mm = jnp.pad(x_mm, ((0, Bp - B), (0, 0)))
    w1_mm = w1.astype(mm_dtype)                                         # (embedSize, resSize)
    wc_mm = jnp.pad(wc, ((0, ncp - nclass), (0, 0))).astype(mm_dtype)   # (ncp, embedSize)
    b1_2d = b1.reshape(1, embed_size).astype(jnp.float32)
    bc_2d = jnp.pad(bc, (0, ncp - nclass)).reshape(1, ncp).astype(jnp.float32)

    flops = 2 * Bp * res_size * embed_size + 2 * Bp * embed_size * ncp
    bytes_accessed = (x_mm.size * mm_bytes + w1_mm.size * mm_bytes + wc_mm.size * mm_bytes
                      + (b1_2d.size + bc_2d.size) * 4 + Bp * ncp * 4)

    out = pl.pallas_call(
        _make_kernel(nclass, ncp),
        out_shape=jax.ShapeDtypeStruct((Bp, ncp), jnp.float32),
        grid=(Bp // tb,),
        in_specs=[
            pl.BlockSpec((tb, res_size), lambda i: (i, 0)),          # x: tiled over batch
            pl.BlockSpec((embed_size, res_size), lambda i: (0, 0)),  # w1: VMEM-resident
            pl.BlockSpec((1, embed_size), lambda i: (0, 0)),         # b1: resident
            pl.BlockSpec((ncp, embed_size), lambda i: (0, 0)),       # wc: resident
            pl.BlockSpec((1, ncp), lambda i: (0, 0)),                # bc: resident
        ],
        out_specs=pl.BlockSpec((tb, ncp), lambda i: (i, 0)),
        compiler_params=pltpu.CompilerParams(
            dimension_semantics=("parallel",),
            vmem_limit_bytes=vmem_limit,
        ),
        cost_estimate=pl.CostEstimate(
            flops=flops,
            transcendentals=Bp * ncp + Bp,
            bytes_accessed=bytes_accessed,
        ),
    )(x_mm, w1_mm, b1_2d, wc_mm, bc_2d)

    return out[:B, :nclass]


def reference(x, w1, b1, wc, bc):
    h = jnp.maximum(x @ w1.T + b1, 0.0)
    logits = h @ wc.T + bc
    return jax.nn.log_softmax(logits, axis=1)


if __name__ == "__main__":
    # Small shapes consistent with the module: resSize -> embedSize -> nclass
    B, resSize, embedSize, nclass = 8, 32, 64, 16

    key = jax.random.PRNGKey(0)
    kx, kw1, kwc = jax.random.split(key, 3)

    x = jax.random.normal(kx, (B, resSize), dtype=jnp.float32)
    # weights_init: Linear weights ~ N(0, 0.02), biases = 0
    w1 = 0.02 * jax.random.normal(kw1, (embedSize, resSize), dtype=jnp.float32)
    b1 = jnp.zeros((embedSize,), dtype=jnp.float32)
    wc = 0.02 * jax.random.normal(kwc, (nclass, embedSize), dtype=jnp.float32)
    bc = jnp.zeros((nclass,), dtype=jnp.float32)

    ref = reference(x, w1, b1, wc, bc)

    # f32 MXU path (matches reference tightly).
    out = jax.block_until_ready(linear_logsoftmax(x, w1, b1, wc, bc))
    assert out.shape == (B, nclass)
    assert jnp.allclose(out, ref, atol=1e-5, rtol=1e-5), "f32 mismatch vs reference"

    # bf16 MXU operands, f32 accumulation + f32 softmax (v5e/v6e/v7x MXU fast path).
    out_bf16 = jax.block_until_ready(
        linear_logsoftmax(x, w1, b1, wc, bc, matmul_dtype=jnp.bfloat16))
    assert out_bf16.shape == (B, nclass)
    assert jnp.allclose(out_bf16, ref, atol=2e-2, rtol=1e-2), "bf16 mismatch vs reference"

    print("KERNEL_OK")
</pallas_src>

<mosaic_0001>
module attributes {stable_mosaic.version = 11 : i64} {
  func.func @kernel(%arg0: i32, %arg1: memref<8x32xf32, #tpu.memory_space<vmem>>, %arg2: memref<64x32xf32, #tpu.memory_space<vmem>>, %arg3: memref<1x64xf32, #tpu.memory_space<vmem>>, %arg4: memref<128x64xf32, #tpu.memory_space<vmem>>, %arg5: memref<1x128xf32, #tpu.memory_space<vmem>>, %arg6: memref<8x128xf32, #tpu.memory_space<vmem>>) attributes {dimension_semantics = [#tpu.dimension_semantics<parallel>], iteration_bounds = array<i64: 1>, scalar_prefetch = 0 : i64, scratch_operands = 0 : i64, tpu.core_type = #tpu.core_type<tc>, window_params = [{transform_indices = @transform_0, window_bounds = array<i64: 8, 32>}, {pipeline_mode = #tpu.pipeline_mode<synchronous>, transform_indices = @transform_1, window_bounds = array<i64: 64, 32>}, {pipeline_mode = #tpu.pipeline_mode<synchronous>, transform_indices = @transform_2, window_bounds = array<i64: 1, 64>}, {pipeline_mode = #tpu.pipeline_mode<synchronous>, transform_indices = @transform_3, window_bounds = array<i64: 128, 64>}, {pipeline_mode = #tpu.pipeline_mode<synchronous>, transform_indices = @transform_4, window_bounds = array<i64: 1, 128>}, {transform_indices = @transform_5, window_bounds = array<i64: 8, 128>}]} {
    %c0 = arith.constant 0 : index
    %c0_0 = arith.constant 0 : index
    %0 = vector.load %arg1[%c0, %c0_0] : memref<8x32xf32, #tpu.memory_space<vmem>>, vector<8x32xf32>
    %c0_1 = arith.constant 0 : index
    %c0_2 = arith.constant 0 : index
    %1 = vector.load %arg2[%c0_1, %c0_2] : memref<64x32xf32, #tpu.memory_space<vmem>>, vector<64x32xf32>
    %cst = arith.constant dense<0.000000e+00> : vector<8x64xf32>
    %2 = tpu.matmul %0, %1, %cst {dimension_numbers = #tpu.dot_dimension_numbers<[1], [1], [0], [0], [0, 0, 1, 0], [], []>} : vector<8x32xf32>, vector<64x32xf32>, vector<8x64xf32> -> vector<8x64xf32>
    %c0_3 = arith.constant 0 : index
    %c0_4 = arith.constant 0 : index
    %3 = vector.load %arg3[%c0_3, %c0_4] : memref<1x64xf32, #tpu.memory_space<vmem>>, vector<1x64xf32>
    %4 = vector.broadcast %3 : vector<1x64xf32> to vector<8x64xf32>
    %5 = arith.addf %2, %4 : vector<8x64xf32>
    %cst_5 = arith.constant 0.000000e+00 : f32
    %6 = vector.broadcast %cst_5 : f32 to vector<8x64xf32>
    %7 = arith.maximumf %5, %6 : vector<8x64xf32>
    %c0_6 = arith.constant 0 : index
    %c0_7 = arith.constant 0 : index
    %8 = vector.load %arg4[%c0_6, %c0_7] : memref<128x64xf32, #tpu.memory_space<vmem>>, vector<128x64xf32>
    %cst_8 = arith.constant dense<0.000000e+00> : vector<8x128xf32>
    %9 = tpu.matmul %7, %8, %cst_8 {dimension_numbers = #tpu.dot_dimension_numbers<[1], [1], [0], [0], [0, 0, 1, 0], [], []>} : vector<8x64xf32>, vector<128x64xf32>, vector<8x128xf32> -> vector<8x128xf32>
    %c0_9 = arith.constant 0 : index
    %c0_10 = arith.constant 0 : index
    %10 = vector.load %arg5[%c0_9, %c0_10] : memref<1x128xf32, #tpu.memory_space<vmem>>, vector<1x128xf32>
    %11 = vector.broadcast %10 : vector<1x128xf32> to vector<8x128xf32>
    %12 = arith.addf %9, %11 : vector<8x128xf32>
    %13 = tpu.iota {dimensions = array<i32: 1>} : vector<8x128xi32>
    %c16_i32 = arith.constant 16 : i32
    %14 = vector.broadcast %c16_i32 : i32 to vector<8x128xi32>
    %15 = arith.cmpi slt, %13, %14 : vector<8x128xi32>
    %cst_11 = arith.constant 0xFF800000 : f32
    %16 = vector.broadcast %cst_11 : f32 to vector<8x128xf32>
    %17 = arith.select %15, %12, %16 : vector<8x128xi1>, vector<8x128xf32>
    %cst_12 = arith.constant dense<0xFF800000> : vector<8xf32>
    %18 = vector.multi_reduction <maximumf>, %17, %cst_12 [1] : vector<8x128xf32> to vector<8xf32>
    %19 = vector.shape_cast %18 : vector<8xf32> to vector<8x1xf32>
    %20 = vector.broadcast %19 : vector<8x1xf32> to vector<8x128xf32>
    %21 = arith.subf %17, %20 : vector<8x128xf32>
    %22 = math.exp %21 : vector<8x128xf32>
    %cst_13 = arith.constant dense<0.000000e+00> : vector<8xf32>
    %23 = vector.multi_reduction <add>, %22, %cst_13 [1] : vector<8x128xf32> to vector<8xf32>
    %24 = vector.shape_cast %23 : vector<8xf32> to vector<8x1xf32>
    %25 = math.log %24 : vector<8x1xf32>
    %26 = vector.broadcast %25 : vector<8x1xf32> to vector<8x128xf32>
    %27 = arith.subf %21, %26 : vector<8x128xf32>
    %c0_14 = arith.constant 0 : index
    %c0_15 = arith.constant 0 : index
    %28 = vector.load %arg6[%c0_14, %c0_15] : memref<8x128xf32, #tpu.memory_space<vmem>>, vector<8x128xf32>
    tpu.vector_store %arg6[%c0_14, %c0_15], %27 {strides = array<i32>} : memref<8x128xf32, #tpu.memory_space<vmem>>, vector<8x128xf32>,
    return
  }
  func.func @transform_0(%arg0: i32) -> (i32, i32) {
    %c0_i32 = arith.constant 0 : i32
    %c0_i32_0 = arith.constant 0 : i32
    return %arg0, %c0_i32 : i32, i32
  }
  func.func @transform_1(%arg0: i32) -> (i32, i32) {
    %c0_i32 = arith.constant 0 : i32
    %c0_i32_0 = arith.constant 0 : i32
    %c0_i32_1 = arith.constant 0 : i32
    return %c0_i32, %c0_i32_0 : i32, i32
  }
  func.func @transform_2(%arg0: i32) -> (i32, i32) {
    %c0_i32 = arith.constant 0 : i32
    %c0_i32_0 = arith.constant 0 : i32
    %c0_i32_1 = arith.constant 0 : i32
    return %c0_i32, %c0_i32_0 : i32, i32
  }
  func.func @transform_3(%arg0: i32) -> (i32, i32) {
    %c0_i32 = arith.constant 0 : i32
    %c0_i32_0 = arith.constant 0 : i32
    %c0_i32_1 = arith.constant 0 : i32
    return %c0_i32, %c0_i32_0 : i32, i32
  }
  func.func @transform_4(%arg0: i32) -> (i32, i32) {
    %c0_i32 = arith.constant 0 : i32
    %c0_i32_0 = arith.constant 0 : i32
    %c0_i32_1 = arith.constant 0 : i32
    return %c0_i32, %c0_i32_0 : i32, i32
  }
  func.func @transform_5(%arg0: i32) -> (i32, i32) {
    %c0_i32 = arith.constant 0 : i32
    %c0_i32_0 = arith.constant 0 : i32
    return %arg0, %c0_i32 : i32, i32
  }
}

</mosaic_0001>

<llo_original>
// kernel: linear_logsoftmax.1
$region0: #{linear_logsoftmax.1}
  #allocation0 [shape = 'u32[]', space=smem, size = 0x4, offset = 0x4, fixed_abs, tag = 'smem constant byte address 0x4 - core index']
  #allocation1 [shape = 'u32[144,128]{1,0:T(1,128)}', space=vmem, size = 0x12000, scoped, tag = 'internal scratch']
  %s0 = inlined_call_operand.vmem [shape: f32[8,32], index: 0, kind: input, shape index: {}]
  %s1 = inlined_call_operand.vmem [shape: f32[64,32], index: 1, kind: input, shape index: {}]
  %s2 = inlined_call_operand.vmem [shape: f32[1,64], index: 2, kind: input, shape index: {}]
  %s3 = inlined_call_operand.vmem [shape: f32[128,64], index: 3, kind: input, shape index: {}]
  %s4 = inlined_call_operand.vmem [shape: f32[1,128], index: 4, kind: input, shape index: {}]
  %s5 = inlined_call_operand.hbm [shape: f32[8,128], index: 5, kind: output, shape index: {}]
  %s6 = sld [smem:[#allocation0]]
  $region30: #{linear_logsoftmax.1} parent=0
    _
  %s8 = ssub.s32 1, %s6
  %s9 = scalar_select 0, %s8, %s6
  $region1: #{linear_logsoftmax.1} parent=0
    #allocation2 [shape = 'u8[4096]{0}', space=vmem, size = 0x1000, scoped, tag = 'output window, operand 0, single buffered']
    #allocation3 [shape = 's32[1]{0}', space=sflag, size = 0x4, scoped, tag = 'scoped memory for linear_logsoftmax.1']
    %10 = vsyncpa [#allocation3], 0
    // Predicated region
    $region2: #{linear_logsoftmax.1} parent=1 // pred_check
      _
    $region3: #{linear_logsoftmax.1} parent=1 // pred_check_branch
      %12 = sbr.rel (0) target = $region5
    $region4: #{linear_logsoftmax.1} parent=1 // pred_region
      _
    $region5: #{linear_logsoftmax.1} parent=1 // pred_fallthru
      _
    // Predicated region
    $region6: #{linear_logsoftmax.1} parent=1 // pred_check
      _
    $region7: #{linear_logsoftmax.1} parent=1 // pred_check_branch
      %14 = sbr.rel (0) target = $region9
    $region8: #{linear_logsoftmax.1} parent=1 // pred_region
      _
    $region9: #{linear_logsoftmax.1} parent=1 // pred_fallthru
      _
    // Predicated region
    $region10: #{linear_logsoftmax.1} parent=1 // pred_check
      _
    $region11: #{linear_logsoftmax.1} parent=1 // pred_check_branch
      %16 = sbr.rel (0) target = $region13
    $region12: #{linear_logsoftmax.1} parent=1 // pred_region
      _
    $region13: #{linear_logsoftmax.1} parent=1 // pred_fallthru
      _
    // Predicated region
    $region14: #{linear_logsoftmax.1} parent=1 // pred_check
      _
    $region15: #{linear_logsoftmax.1} parent=1 // pred_check_branch
      %18 = sbr.rel (0) target = $region17
    $region16: #{linear_logsoftmax.1} parent=1 // pred_region
      _
    $region17: #{linear_logsoftmax.1} parent=1 // pred_fallthru
      _
    // Predicated region
    $region18: #{linear_logsoftmax.1} parent=1 // pred_check
      _
    $region19: #{linear_logsoftmax.1} parent=1 // pred_check_branch
      %20 = sbr.rel (0) target = $region21
    $region20: #{linear_logsoftmax.1} parent=1 // pred_region
      _
    $region21: #{linear_logsoftmax.1} parent=1 // pred_fallthru
      _
    %v21 = vld [vmem:[%s0] sm:$0xff]
    %v22 = vld [vmem:[%s1] sm:$0xff]
    %v23 = vld [vmem:[%s1 + $0x8] sm:$0xff]
    %v24 = vld [vmem:[%s1 + $0x10] sm:$0xff]
    %v25 = vld [vmem:[%s1 + $0x18] sm:$0xff]
    %v26 = vld [vmem:[%s1 + $0x20] sm:$0xff]
    %v27 = vld [vmem:[%s1 + $0x28] sm:$0xff]
    %v28 = vld [vmem:[%s1 + $0x30] sm:$0xff]
    %v29 = vld [vmem:[%s1 + $0x38] sm:$0xff]
    %v30 = vld [vmem:[%s2] sm:$0x1]
    %v32 = vlaneseq
    %v33 = vshrl.u32 %v32, 7
    %v34 = vsub.s32 0, %v33
    %v35 = vrot.slane %v30, %v34
    %vm37 = vcmask 261120
    %v39 = vsel %vm37, %v21, 0
    %v42 = vsel %vm37, %v22, 0
    %v45 = vsel %vm37, %v23, 0
    %v48 = vsel %vm37, %v24, 0
    %v51 = vsel %vm37, %v25, 0
    %v54 = vsel %vm37, %v26, 0
    %v57 = vsel %vm37, %v27, 0
    %v60 = vsel %vm37, %v28, 0
    %v63 = vsel %vm37, %v29, 0
    %65 = vmatprep.subr.mxu0 0.0
    %66 = vmatpush1.xpose.msra.mxu0 %v42
    %67 = vmatprep.subr.mxu0 0.0
    %68 = vmatpush1.xpose.msra.mxu0 %v45
    %69 = vmatprep.subr.mxu0 0.0
    %70 = vmatpush1.xpose.msra.mxu0 %v48
    %71 = vmatprep.subr.mxu0 0.0
    %72 = vmatpush1.xpose.msra.mxu0 %v51
    %73 = vmatprep.subr.mxu0 0.0
    %74 = vmatpush1.xpose.msra.mxu0 %v54
    %75 = vmatprep.subr.mxu0 0.0
    %76 = vmatpush1.xpose.msra.mxu0 %v57
    %77 = vmatprep.subr.mxu0 0.0
    %78 = vmatpush1.xpose.msra.mxu0 %v60
    %79 = vmatprep.subr.mxu0 0.0
    %80 = vmatpush1.xpose.msra.mxu0 %v63
    %81 = vmatprep.subr.mxu0 0.0
    %82 = vmatpush1.xpose.msra.mxu0 0.0
    %83 = vmatprep.subr.mxu0 0.0
    %84 = vmatpush1.xpose.msra.mxu0 0.0
    %85 = vmatprep.subr.mxu0 0.0
    %86 = vmatpush1.xpose.msra.mxu0 0.0
    %87 = vmatprep.subr.mxu0 0.0
    %88 = vmatpush1.xpose.msra.mxu0 0.0
    %89 = vmatprep.subr.mxu0 0.0
    %90 = vmatpush1.xpose.msra.mxu0 0.0
    %91 = vmatprep.subr.mxu0 0.0
    %92 = vmatpush1.xpose.msra.mxu0 0.0
    %93 = vmatprep.subr.mxu0 0.0
    %94 = vmatpush1.xpose.msra.mxu0 0.0
    %95 = vmatprep.subr.mxu0 0.0
    %96 = vmatpush1.xpose.msra.mxu0 0.0
    %97 = vmatprep.subr.mxu0 0.0
    %98 = vmatpush1.xpose.msra.mxu0 0.0
    %99 = vmatprep.subr.mxu0 0.0
    %100 = vmatpush1.xpose.msra.mxu0 0.0
    %101 = vmatprep.subr.mxu0 0.0
    %102 = vmatpush1.xpose.msra.mxu0 0.0
    %103 = vmatprep.subr.mxu0 0.0
    %104 = vmatpush1.xpose.msra.mxu0 0.0
    %105 = vmatprep.subr.mxu0 0.0
    %106 = vmatpush1.xpose.msra.mxu0 0.0
    %107 = vmatprep.subr.mxu0 0.0
    %108 = vmatpush1.xpose.msra.mxu0 0.0
    %109 = vmatprep.subr.mxu0 0.0
    %110 = vmatpush1.xpose.msra.mxu0 0.0
    %111 = vmatprep.subr.mxu0 0.0
    %112 = vmatpush1.xpose.msra.mxu0 0.0
    %113 = vmatprep.subr.mxu0 0.0
    %114 = vmatpush1.xpose.msra.mxu0 0.0
    %115 = vmatprep.subr.mxu0 0.0
    %116 = vmatpush1.xpose.msra.mxu0 0.0
    %117 = vmatprep.subr.mxu0 0.0
    %118 = vmatpush1.xpose.msra.mxu0 0.0
    %119 = vmatprep.subr.mxu0 0.0
    %120 = vmatpush1.xpose.msra.mxu0 0.0
    %121 = vmatprep.subr.mxu0 0.0
    %122 = vmatpush1.xpose.msra.mxu0 0.0
    %123 = vmatprep.subr.mxu0 0.0
    %124 = vmatpush1.xpose.msra.mxu0 0.0
    %125 = vmatprep.subr.mxu0 0.0
    %126 = vmatpush1.xpose.msra.mxu0 0.0
    %127 = vmatprep.subr.mxu0 0.0
    %128 = vmatpush1.xpose.msra.mxu0 0.0
    %129 = vmatprep.mubr.f32.mxu0 0.0
    %130 = vmatmul.mubr.f32.gmra.mrb[0].mxu0 %v39
    %v131 = vpop.f32.mrb[0].mxu0
    %v132 = vadd.f32 %v35, %v131
    %v133 = vpop.f32.mrb[0].mxu0
    %134 = vdwg.mxu0
    %v135 = vmax.f32 %v132, 0.0
    %v136 = vld [vmem:[%s3] sm:$0xff]
    %v137 = vld [vmem:[%s3 + $0x8] sm:$0xff]
    %v138 = vld [vmem:[%s3 + $0x10] sm:$0xff]
    %v139 = vld [vmem:[%s3 + $0x18] sm:$0xff]
    %v140 = vld [vmem:[%s3 + $0x20] sm:$0xff]
    %v141 = vld [vmem:[%s3 + $0x28] sm:$0xff]
    %v142 = vld [vmem:[%s3 + $0x30] sm:$0xff]
    %v143 = vld [vmem:[%s3 + $0x38] sm:$0xff]
    %v144 = vld [vmem:[%s3 + $0x40] sm:$0xff]
    %v145 = vld [vmem:[%s3 + $0x48] sm:$0xff]
    %v146 = vld [vmem:[%s3 + $0x50] sm:$0xff]
    %v147 = vld [vmem:[%s3 + $0x58] sm:$0xff]
    %v148 = vld [vmem:[%s3 + $0x60] sm:$0xff]
    %v149 = vld [vmem:[%s3 + $0x68] sm:$0xff]
    %v150 = vld [vmem:[%s3 + $0x70] sm:$0xff]
    %v151 = vld [vmem:[%s3 + $0x78] sm:$0xff]
    %v152 = vld [vmem:[%s4] sm:$0x1]
    %v154 = vlaneseq
    %v155 = vshrl.u32 %v154, 7
    %v156 = vsub.s32 0, %v155
    %v157 = vrot.slane %v152, %v156
    %vm159 = vcmask 523264
    %v161 = vsel %vm159, %v135, 0
    %v164 = vsel %vm159, %v136, 0
    %v167 = vsel %vm159, %v137, 0
    %v170 = vsel %vm159, %v138, 0
    %v173 = vsel %vm159, %v139, 0
    %v176 = vsel %vm159, %v140, 0
    %v179 = vsel %vm159, %v141, 0
    %v182 = vsel %vm159, %v142, 0
    %v185 = vsel %vm159, %v143, 0
    %v188 = vsel %vm159, %v144, 0
    %v191 = vsel %vm159, %v145, 0
    %v194 = vsel %vm159, %v146, 0
    %v197 = vsel %vm159, %v147, 0
    %v200 = vsel %vm159, %v148, 0
    %v203 = vsel %vm159, %v149, 0
    %v206 = vsel %vm159, %v150, 0
    %v209 = vsel %vm159, %v151, 0
    %211 = vmatprep.subr.mxu0 0.0
    %212 = vmatpush1.xpose.msra.mxu0 %v164
    %213 = vmatprep.subr.mxu0 0.0
    %214 = vmatpush1.xpose.msra.mxu0 %v167
    %215 = vmatprep.subr.mxu0 0.0
    %216 = vmatpush1.xpose.msra.mxu0 %v170
    %217 = vmatprep.subr.mxu0 0.0
    %218 = vmatpush1.xpose.msra.mxu0 %v173
    %219 = vmatprep.subr.mxu0 0.0
    %220 = vmatpush1.xpose.msra.mxu0 %v176
    %221 = vmatprep.subr.mxu0 0.0
    %222 = vmatpush1.xpose.msra.mxu0 %v179
    %223 = vmatprep.subr.mxu0 0.0
    %224 = vmatpush1.xpose.msra.mxu0 %v182
    %225 = vmatprep.subr.mxu0 0.0
    %226 = vmatpush1.xpose.msra.mxu0 %v185
    %227 = vmatprep.subr.mxu0 0.0
    %228 = vmatpush1.xpose.msra.mxu0 %v188
    %229 = vmatprep.subr.mxu0 0.0
    %230 = vmatpush1.xpose.msra.mxu0 %v191
    %231 = vmatprep.subr.mxu0 0.0
    %232 = vmatpush1.xpose.msra.mxu0 %v194
    %233 = vmatprep.subr.mxu0 0.0
    %234 = vmatpush1.xpose.msra.mxu0 %v197
    %235 = vmatprep.subr.mxu0 0.0
    %236 = vmatpush1.xpose.msra.mxu0 %v200
    %237 = vmatprep.subr.mxu0 0.0
    %238 = vmatpush1.xpose.msra.mxu0 %v203
    %239 = vmatprep.subr.mxu0 0.0
    %240 = vmatpush1.xpose.msra.mxu0 %v206
    %241 = vmatprep.subr.mxu0 0.0
    %242 = vmatpush1.xpose.msra.mxu0 %v209
    %243 = vmatprep.subr.mxu0 0.0
    %244 = vmatpush1.xpose.msra.mxu0 0.0
    %245 = vmatprep.subr.mxu0 0.0
    %246 = vmatpush1.xpose.msra.mxu0 0.0
    %247 = vmatprep.subr.mxu0 0.0
    %248 = vmatpush1.xpose.msra.mxu0 0.0
    %249 = vmatprep.subr.mxu0 0.0
    %250 = vmatpush1.xpose.msra.mxu0 0.0
    %251 = vmatprep.subr.mxu0 0.0
    %252 = vmatpush1.xpose.msra.mxu0 0.0
    %253 = vmatprep.subr.mxu0 0.0
    %254 = vmatpush1.xpose.msra.mxu0 0.0
    %255 = vmatprep.subr.mxu0 0.0
    %256 = vmatpush1.xpose.msra.mxu0 0.0
    %257 = vmatprep.subr.mxu0 0.0
    %258 = vmatpush1.xpose.msra.mxu0 0.0
    %259 = vmatprep.subr.mxu0 0.0
    %260 = vmatpush1.xpose.msra.mxu0 0.0
    %261 = vmatprep.subr.mxu0 0.0
    %262 = vmatpush1.xpose.msra.mxu0 0.0
    %263 = vmatprep.subr.mxu0 0.0
    %264 = vmatpush1.xpose.msra.mxu0 0.0
    %265 = vmatprep.subr.mxu0 0.0
    %266 = vmatpush1.xpose.msra.mxu0 0.0
    %267 = vmatprep.subr.mxu0 0.0
    %268 = vmatpush1.xpose.msra.mxu0 0.0
    %269 = vmatprep.subr.mxu0 0.0
    %270 = vmatpush1.xpose.msra.mxu0 0.0
    %271 = vmatprep.subr.mxu0 0.0
    %272 = vmatpush1.xpose.msra.mxu0 0.0
    %273 = vmatprep.subr.mxu0 0.0
    %274 = vmatpush1.xpose.msra.mxu0 0.0
    %275 = vmatprep.mubr.f32.mxu0 0.0
    %276 = vmatmul.mubr.f32.gmra.mrb[0].mxu0 %v161
    %v277 = vpop.f32.mrb[0].mxu0
    %v278 = vadd.f32 %v157, %v277
    %v279 = vpop.f32.mrb[0].mxu0
    %280 = vdwg.mxu0
    %v281 = vlaneseq
    %v282 = vand.u32 %v281, 127
    %vm283 = vcmp.lt.s32.totalorder %v282, 16
    %v284 = vsel %vm283, %v278, -inf
    %285 = vmax.xlane.f32.xlu0 %v284
    %v286 = vpop.xlane.xlu0 %285
    %v287 = vsub.f32 %v284, %v286
    %v288 = vmul.f32 %v287, 1.442695
    %v289 = vpow.pop %v288
    %290 = vadd.xlane.f32.xlu0 %v289
    %v291 = vpop.xlane.xlu0 %290
    %v292 = vlog2.pop %v291
    %v293 = vmul.f32 %v292, 0.6931472
    %v294 = vsub.f32 %v287, %v293
    %295 = vst [vmem:[#allocation2] sm:$0xff] %v294
    // Predicated region
    $region22: #{linear_logsoftmax.1} parent=1 // pred_check
      _
    $region23: #{linear_logsoftmax.1} parent=1 // pred_check_branch
      %297 = sbr.rel (0) target = $region25
    $region24: #{linear_logsoftmax.1} parent=1 // pred_region
      %s299 = ssub.s32 128, 128
      %300 = vsyncadd [#allocation3], %s299
      %s302 = sshll.u32 [#allocation2], 4
      %s303 = int_to_ptr.vmem [resolvable:$true] %s302
      %305 = dma.vmem_to_hbm [thread:$0]  %s303, 128, %s5, [#allocation3]
    $region25: #{linear_logsoftmax.1} parent=1 // pred_fallthru
      _
    // Predicated region
    $region26: #{linear_logsoftmax.1} parent=1 // pred_check
      _
    $region27: #{linear_logsoftmax.1} parent=1 // pred_check_branch
      %307 = sbr.rel (0) target = $region29
    $region28: #{linear_logsoftmax.1} parent=1 // pred_region
      %308 = dma.done [#allocation3], 128
    $region29: #{linear_logsoftmax.1} parent=1 // pred_fallthru
      _
    %309 = vsyncpa [#allocation3], 1

</llo_original>
